<compile_context>
chip_gen: v7x
topology: tpu7x:2x2x1
jax: 0.10.0
libtpu: 0.0.40
codegen_flags: <defaults>
</compile_context>

<pallas_src>
import functools

import jax
import jax.numpy as jnp
from jax.experimental import pallas as pl
from jax.experimental.pallas import tpu as pltpu

LANES = 128            # vreg lane width
SUBLANES = 8           # f32 sublanes per vreg
ACC_ROWS = 32          # (32, 128) accumulator = 4 independent (8,128) chains
MAX_BLOCK_ROWS = 4096  # (4096, 128) f32 = 2 MiB per input block
NUM_CORES = 2          # leading "parallel" axis; both TCs on v7x, no-op elsewhere


def _pow_small(x, gamma):
    """x ** gamma; unrolled VPU multiplies for small integer gamma."""
    g = float(gamma)
    if g == int(g) and 0 <= int(g) <= 8:
        gi = int(g)
        if gi == 0:
            return jnp.ones_like(x)
        r = x
        for _ in range(gi - 1):
            r = r * x
        return r
    return x ** g  # fallback: float exponent (EUP exp/log)


def _focal_loss_kernel(x_ref, t_ref, out_ref, acc_ref, *, gamma, binary_targets,
                       total_rows, block_rows, nblocks, steps):
    c = pl.program_id(0)   # core split (parallel)
    i = pl.program_id(1)   # row-block stream (reduction)
    b = c * steps + i      # global row-block index (may be a phantom block)

    @pl.when(i == 0)
    def _():
        acc_ref[...] = jnp.zeros_like(acc_ref)

    x = x_ref[...].astype(jnp.float32)
    t = t_ref[...].astype(jnp.float32)

    if binary_targets:
        # t in {0,1}: probability of the true class; 1 log, 0 exp per element.
        p_t = t * x + (1.0 - t) * (1.0 - x)
        bce = -jnp.maximum(jnp.log(p_t), -100.0)
        pt = p_t
    else:
        # Exact binary_cross_entropy (PyTorch clamps log at -100).
        log_x = jnp.maximum(jnp.log(x), -100.0)
        log_1mx = jnp.maximum(jnp.log(1.0 - x), -100.0)
        bce = -(t * log_x + (1.0 - t) * log_1mx)
        pt = jnp.exp(-bce)

    # alpha and 1/n are folded into the wrapper-side final scale.
    fl = _pow_small(1.0 - pt, gamma) * bce

    def _accum(v):
        # Collapse the block into the (32, 128) accumulator: 4 independent
        # (8,128) partial-sum chains keep the VPU add latency hidden.
        acc_ref[...] += v.reshape(-1, ACC_ROWS, LANES).sum(axis=0)

    if nblocks * block_rows == total_rows and NUM_CORES * steps == nblocks:
        # Tiling divides evenly and no phantom blocks: never mask.
        _accum(fl)
    else:
        full = (b + 1) * block_rows <= total_rows

        @pl.when(full)
        def _():
            _accum(fl)

        @pl.when(jnp.logical_not(full))
        def _():
            # Partial or phantom block: mask rows past the end of the array.
            # jnp.where lowers to a lane select, so NaNs from the undefined
            # padded rows never reach the accumulator.
            limit = total_rows - b * block_rows  # <= 0 for phantom blocks
            row_ids = jax.lax.broadcasted_iota(jnp.int32, fl.shape, 0)
            _accum(jnp.where(row_ids < limit, fl, 0.0))

    @pl.when(i == steps - 1)
    def _():
        out_ref[...] = acc_ref[...].reshape(1, ACC_ROWS, LANES)


def focal_loss(inputs, targets, alpha=0.25, gamma=2, logits=False, reduce=True,
               binary_targets=False):
    """Pallas implementation of FocalLoss.forward (logits=False, reduce=True).

    binary_targets=True enables the single-log fast path (exact for t in {0,1}).
    """
    assert inputs.shape == targets.shape
    if logits:
        # TODO(synk): binary_cross_entropy_with_logits path not wired.
        raise NotImplementedError("logits=True not implemented in Pallas path")
    if not reduce:
        # TODO(synk): reduce=False (per-element focal loss) not wired.
        raise NotImplementedError("reduce=False not implemented in Pallas path")

    n = inputs.size
    x_flat = inputs.reshape(-1)
    t_flat = targets.reshape(-1)

    # Lane-align. Common case (n % 128 == 0) is a free reshape, no HBM copy.
    rem = n % LANES
    if rem:
        # TODO(synk): this pad costs an extra HBM round trip when n is not
        # lane-aligned; copy-free handling needs a manual flat-DMA path.
        pad = LANES - rem
        # (x=1, t=1) gives FL == 0 exactly in both kernel paths.
        x_flat = jnp.pad(x_flat, (0, pad), constant_values=1.0)
        t_flat = jnp.pad(t_flat, (0, pad), constant_values=1.0)

    total_rows = x_flat.size // LANES
    x2d = x_flat.reshape(total_rows, LANES)
    t2d = t_flat.reshape(total_rows, LANES)

    # Big lane-dense tiles, ACC_ROWS-aligned (also matches bf16 (16,128) tiles).
    block_rows = min(MAX_BLOCK_ROWS, pl.cdiv(total_rows, ACC_ROWS) * ACC_ROWS)
    nblocks = pl.cdiv(total_rows, block_rows)
    steps = pl.cdiv(nblocks, NUM_CORES)        # row blocks per core

    if NUM_CORES * steps == nblocks:
        in_map = lambda c, i: (c * steps + i, 0)
    else:
        # Phantom trailing block(s): clamp to the last real block; contributes
        # exactly 0 because the kernel masks it out entirely.
        in_map = lambda c, i: (jnp.minimum(c * steps + i, nblocks - 1), 0)

    kernel = functools.partial(
        _focal_loss_kernel, gamma=gamma, binary_targets=binary_targets,
        total_rows=total_rows, block_rows=block_rows, nblocks=nblocks,
        steps=steps)

    partials = pl.pallas_call(
        kernel,
        out_shape=jax.ShapeDtypeStruct((NUM_CORES, ACC_ROWS, LANES), jnp.float32),
        grid_spec=pltpu.PrefetchScalarGridSpec(
            num_scalar_prefetch=0,
            grid=(NUM_CORES, steps),
            in_specs=[
                pl.BlockSpec((block_rows, LANES), in_map),
                pl.BlockSpec((block_rows, LANES), in_map),
            ],
            out_specs=pl.BlockSpec((1, ACC_ROWS, LANES), lambda c, i: (c, 0, 0)),
            scratch_shapes=[pltpu.VMEM((ACC_ROWS, LANES), jnp.float32)],
        ),
        compiler_params=pltpu.CompilerParams(
            dimension_semantics=("parallel", "arbitrary")),
    )(x2d, t2d)

    # alpha and 1/n folded out of the hot loop: one tiny XLA reduce + scale.
    return jnp.sum(partials) * (alpha / float(n))


def _focal_loss_ref(inputs, targets, alpha=0.25, gamma=2):
    x = inputs.astype(jnp.float32)
    t = targets.astype(jnp.float32)
    log_x = jnp.maximum(jnp.log(x), -100.0)
    log_1mx = jnp.maximum(jnp.log(1.0 - x), -100.0)
    bce = -(t * log_x + (1.0 - t) * log_1mx)
    pt = jnp.exp(-bce)
    return jnp.mean(alpha * (1.0 - pt) ** gamma * bce)


if __name__ == "__main__":
    key = jax.random.PRNGKey(0)
    k1, k2, k3, k4 = jax.random.split(key, 4)

    # NCHW, as in the PyTorch usage (probabilities in (0,1), binary targets).
    B, C, H, W = 2, 4, 16, 16
    inputs = jax.random.uniform(k1, (B, C, H, W), jnp.float32,
                                minval=1e-4, maxval=1.0 - 1e-4)
    targets = (jax.random.uniform(k2, (B, C, H, W), jnp.float32) > 0.5
               ).astype(jnp.float32)

    ref = _focal_loss_ref(inputs, targets)

    # Exact path (default, matches the PyTorch module for arbitrary targets).
    out = focal_loss(inputs, targets)
    jax.block_until_ready(out)
    assert jnp.allclose(out, ref, rtol=1e-5, atol=1e-6), (out, ref)

    # Binary-target fast path (single log, no exp).
    out_fast = focal_loss(inputs, targets, binary_targets=True)
    jax.block_until_ready(out_fast)
    assert jnp.allclose(out_fast, ref, rtol=1e-4, atol=1e-6), (out_fast, ref)

    # Lane-unaligned + partial/phantom block path.
    shp2 = (2, 3, 10, 10)
    inputs2 = jax.random.uniform(k3, shp2, jnp.float32,
                                 minval=1e-4, maxval=1.0 - 1e-4)
    targets2 = (jax.random.uniform(k4, shp2, jnp.float32) > 0.5
                ).astype(jnp.float32)
    out2 = focal_loss(inputs2, targets2)
    jax.block_until_ready(out2)
    ref2 = _focal_loss_ref(inputs2, targets2)
    assert jnp.allclose(out2, ref2, rtol=1e-5, atol=1e-6), (out2, ref2)

    print("KERNEL_OK")
</pallas_src>

<mosaic_0001>
module attributes {stable_mosaic.version = 11 : i64} {
  func.func @_focal_loss_kernel(%arg0: i32, %arg1: i32, %arg2: memref<32x128xf32, #tpu.memory_space<vmem>>, %arg3: memref<32x128xf32, #tpu.memory_space<vmem>>, %arg4: memref<1x32x128xf32, #tpu.memory_space<vmem>>, %arg5: memref<32x128xf32, #tpu.memory_space<vmem>>) attributes {dimension_semantics = [#tpu.dimension_semantics<parallel>, #tpu.dimension_semantics<arbitrary>], iteration_bounds = array<i64: 2, 1>, scalar_prefetch = 0 : i64, scratch_operands = 1 : i64, tpu.core_type = #tpu.core_type<tc>, window_params = [{transform_indices = @transform_0, window_bounds = array<i64: 32, 128>}, {transform_indices = @transform_1, window_bounds = array<i64: 32, 128>}, {transform_indices = @transform_2, window_bounds = array<i64: 1, 32, 128>}]} {
    %c1_i32 = arith.constant 1 : i32
    %0 = arith.muli %arg0, %c1_i32 : i32
    %1 = arith.addi %0, %arg1 : i32
    %c0_i32 = arith.constant 0 : i32
    %2 = arith.cmpi eq, %arg1, %c0_i32 : i32
    %3 = arith.extui %2 : i1 to i32
    %c0_i32_0 = arith.constant 0 : i32
    %4 = arith.cmpi ne, %3, %c0_i32_0 : i32
    scf.if %4 {
      %cst_15 = arith.constant 0.000000e+00 : f32
      %40 = vector.broadcast %cst_15 : f32 to vector<32x128xf32>
      %c0_16 = arith.constant 0 : index
      %c0_17 = arith.constant 0 : index
      %41 = vector.load %arg5[%c0_16, %c0_17] : memref<32x128xf32, #tpu.memory_space<vmem>>, vector<32x128xf32>
      tpu.vector_store %arg5[%c0_16, %c0_17], %40 {strides = array<i32>} : memref<32x128xf32, #tpu.memory_space<vmem>>, vector<32x128xf32>,
    } else {
    }
    %c0 = arith.constant 0 : index
    %c0_1 = arith.constant 0 : index
    %5 = vector.load %arg2[%c0, %c0_1] : memref<32x128xf32, #tpu.memory_space<vmem>>, vector<32x128xf32>
    %c0_2 = arith.constant 0 : index
    %c0_3 = arith.constant 0 : index
    %6 = vector.load %arg3[%c0_2, %c0_3] : memref<32x128xf32, #tpu.memory_space<vmem>>, vector<32x128xf32>
    %7 = math.log %5 : vector<32x128xf32>
    %cst = arith.constant -1.000000e+02 : f32
    %8 = vector.broadcast %cst : f32 to vector<32x128xf32>
    %9 = arith.maximumf %7, %8 : vector<32x128xf32>
    %cst_4 = arith.constant 1.000000e+00 : f32
    %10 = vector.broadcast %cst_4 : f32 to vector<32x128xf32>
    %11 = arith.subf %10, %5 : vector<32x128xf32>
    %12 = math.log %11 : vector<32x128xf32>
    %cst_5 = arith.constant -1.000000e+02 : f32
    %13 = vector.broadcast %cst_5 : f32 to vector<32x128xf32>
    %14 = arith.maximumf %12, %13 : vector<32x128xf32>
    %15 = arith.mulf %6, %9 : vector<32x128xf32>
    %cst_6 = arith.constant 1.000000e+00 : f32
    %16 = vector.broadcast %cst_6 : f32 to vector<32x128xf32>
    %17 = arith.subf %16, %6 : vector<32x128xf32>
    %18 = arith.mulf %17, %14 : vector<32x128xf32>
    %19 = arith.addf %15, %18 : vector<32x128xf32>
    %cst_7 = arith.constant 0.000000e+00 : f32
    %20 = vector.broadcast %cst_7 : f32 to vector<32x128xf32>
    %21 = arith.subf %20, %19 : vector<32x128xf32>
    %cst_8 = arith.constant 0.000000e+00 : f32
    %22 = vector.broadcast %cst_8 : f32 to vector<32x128xf32>
    %23 = arith.subf %22, %21 : vector<32x128xf32>
    %24 = math.exp %23 : vector<32x128xf32>
    %cst_9 = arith.constant 1.000000e+00 : f32
    %25 = vector.broadcast %cst_9 : f32 to vector<32x128xf32>
    %26 = arith.subf %25, %24 : vector<32x128xf32>
    %27 = arith.mulf %26, %26 : vector<32x128xf32>
    %28 = arith.mulf %27, %21 : vector<32x128xf32>
    %c1_i32_10 = arith.constant 1 : i32
    %29 = arith.addi %1, %c1_i32_10 : i32
    %c32_i32 = arith.constant 32 : i32
    %30 = arith.muli %29, %c32_i32 : i32
    %c16_i32 = arith.constant 16 : i32
    %31 = arith.cmpi sle, %30, %c16_i32 : i32
    %32 = arith.extui %31 : i1 to i32
    %c0_i32_11 = arith.constant 0 : i32
    %33 = arith.cmpi ne, %32, %c0_i32_11 : i32
    scf.if %33 {
      %c0_15 = arith.constant 0 : index
      %c0_16 = arith.constant 0 : index
      %40 = vector.load %arg5[%c0_15, %c0_16] : memref<32x128xf32, #tpu.memory_space<vmem>>, vector<32x128xf32>
      %41 = vector.shape_cast %28 : vector<32x128xf32> to vector<1x32x128xf32>
      %cst_17 = arith.constant dense<0.000000e+00> : vector<32x128xf32>
      %42 = vector.multi_reduction <add>, %41, %cst_17 [0] : vector<1x32x128xf32> to vector<32x128xf32>
      %43 = arith.addf %40, %42 : vector<32x128xf32>
      %c0_18 = arith.constant 0 : index
      %c0_19 = arith.constant 0 : index
      %44 = vector.load %arg5[%c0_18, %c0_19] : memref<32x128xf32, #tpu.memory_space<vmem>>, vector<32x128xf32>
      tpu.vector_store %arg5[%c0_18, %c0_19], %43 {strides = array<i32>} : memref<32x128xf32, #tpu.memory_space<vmem>>, vector<32x128xf32>,
    } else {
    }
    %true = arith.constant true
    %34 = arith.xori %31, %true : i1
    %35 = arith.extui %34 : i1 to i32
    %c0_i32_12 = arith.constant 0 : i32
    %36 = arith.cmpi ne, %35, %c0_i32_12 : i32
    scf.if %36 {
      %c32_i32_15 = arith.constant 32 : i32
      %40 = arith.muli %1, %c32_i32_15 : i32
      %c16_i32_16 = arith.constant 16 : i32
      %41 = arith.subi %c16_i32_16, %40 : i32
      %42 = tpu.iota {dimensions = array<i32: 0>} : vector<32x128xi32>
      %43 = vector.broadcast %41 : i32 to vector<32x128xi32>
      %44 = arith.cmpi slt, %42, %43 : vector<32x128xi32>
      %cst_17 = arith.constant 0.000000e+00 : f32
      %45 = vector.broadcast %cst_17 : f32 to vector<32x128xf32>
      %46 = arith.select %44, %28, %45 : vector<32x128xi1>, vector<32x128xf32>
      %c0_18 = arith.constant 0 : index
      %c0_19 = arith.constant 0 : index
      %47 = vector.load %arg5[%c0_18, %c0_19] : memref<32x128xf32, #tpu.memory_space<vmem>>, vector<32x128xf32>
      %48 = vector.shape_cast %46 : vector<32x128xf32> to vector<1x32x128xf32>
      %cst_20 = arith.constant dense<0.000000e+00> : vector<32x128xf32>
      %49 = vector.multi_reduction <add>, %48, %cst_20 [0] : vector<1x32x128xf32> to vector<32x128xf32>
      %50 = arith.addf %47, %49 : vector<32x128xf32>
      %c0_21 = arith.constant 0 : index
      %c0_22 = arith.constant 0 : index
      %51 = vector.load %arg5[%c0_21, %c0_22] : memref<32x128xf32, #tpu.memory_space<vmem>>, vector<32x128xf32>
      tpu.vector_store %arg5[%c0_21, %c0_22], %50 {strides = array<i32>} : memref<32x128xf32, #tpu.memory_space<vmem>>, vector<32x128xf32>,
    } else {
    }
    %c0_i32_13 = arith.constant 0 : i32
    %37 = arith.cmpi eq, %arg1, %c0_i32_13 : i32
    %38 = arith.extui %37 : i1 to i32
    %c0_i32_14 = arith.constant 0 : i32
    %39 = arith.cmpi ne, %38, %c0_i32_14 : i32
    scf.if %39 {
      %c0_15 = arith.constant 0 : index
      %c0_16 = arith.constant 0 : index
      %40 = vector.load %arg5[%c0_15, %c0_16] : memref<32x128xf32, #tpu.memory_space<vmem>>, vector<32x128xf32>
      %41 = vector.shape_cast %40 : vector<32x128xf32> to vector<1x32x128xf32>
      %c0_17 = arith.constant 0 : index
      %c0_18 = arith.constant 0 : index
      %c0_19 = arith.constant 0 : index
      %42 = vector.load %arg4[%c0_17, %c0_18, %c0_19] : memref<1x32x128xf32, #tpu.memory_space<vmem>>, vector<1x32x128xf32>
      tpu.vector_store %arg4[%c0_17, %c0_18, %c0_19], %41 {strides = array<i32>} : memref<1x32x128xf32, #tpu.memory_space<vmem>>, vector<1x32x128xf32>,
    } else {
    }
    return
  }
  func.func @transform_0(%arg0: i32, %arg1: i32) -> (i32, i32) {
    %c1_i32 = arith.constant 1 : i32
    %0 = arith.muli %arg0, %c1_i32 : i32
    %1 = arith.addi %0, %arg1 : i32
    %c0_i32 = arith.constant 0 : i32
    %2 = arith.minsi %1, %c0_i32 : i32
    %c0_i32_0 = arith.constant 0 : i32
    %c0_i32_1 = arith.constant 0 : i32
    return %2, %c0_i32_0 : i32, i32
  }
  func.func @transform_1(%arg0: i32, %arg1: i32) -> (i32, i32) {
    %c1_i32 = arith.constant 1 : i32
    %0 = arith.muli %arg0, %c1_i32 : i32
    %1 = arith.addi %0, %arg1 : i32
    %c0_i32 = arith.constant 0 : i32
    %2 = arith.minsi %1, %c0_i32 : i32
    %c0_i32_0 = arith.constant 0 : i32
    %c0_i32_1 = arith.constant 0 : i32
    return %2, %c0_i32_0 : i32, i32
  }
  func.func @transform_2(%arg0: i32, %arg1: i32) -> (i32, i32, i32) {
    %c0_i32 = arith.constant 0 : i32
    %c0_i32_0 = arith.constant 0 : i32
    %c0_i32_1 = arith.constant 0 : i32
    return %arg0, %c0_i32, %c0_i32_0 : i32, i32, i32
  }
}

</mosaic_0001>

<llo_original>
// kernel: tpu_custom_call.1
$region0: #{tpu_custom_call.1}
  #allocation0 [shape = 'u32[]', space=smem, size = 0x4, offset = 0x4, fixed_abs, tag = 'smem constant byte address 0x4 - core index']
  #allocation1 [shape = 'u32[144,128]{1,0:T(1,128)}', space=vmem, size = 0x12000, scoped, tag = 'internal scratch']
  #allocation2 [shape = 'f32[32,128]{1,0:T(8,128)}', space=vmem, size = 0x4000, scoped, tag = 'scratch operand']
  %s0 = inlined_call_operand.hbm [shape: f32[16,128], index: 0, kind: input, shape index: {}]
  %s1 = inlined_call_operand.hbm [shape: f32[16,128], index: 1, kind: input, shape index: {}]
  %s2 = inlined_call_operand.hbm [shape: f32[2,32,128], index: 2, kind: output, shape index: {}]
  %s3 = sld [smem:[#allocation0]]
  $region65: #{tpu_custom_call.1} parent=0
    _
  %s5 = ssub.s32 1, %s3
  %s6 = scalar_select 0, %s5, %s3
  $region1: #{tpu_custom_call.1} parent=0
    #allocation3 [shape = 'u8[32768]{0}', space=vmem, size = 0x8000, scoped, tag = 'input window, operand 0']
    #allocation4 [shape = 's32[2]{0}', space=sflag, size = 0x8, scoped, tag = 'scoped memory for tpu_custom_call.1']
    #allocation5 [shape = 's32[2]{0}', space=sflag, size = 0x8, scoped, tag = 'scoped memory for tpu_custom_call.1']
    #allocation6 [shape = 'u8[32768]{0}', space=vmem, size = 0x8000, scoped, tag = 'input window, operand 1']
    #allocation7 [shape = 's32[2]{0}', space=sflag, size = 0x8, scoped, tag = 'scoped memory for tpu_custom_call.1']
    #allocation8 [shape = 'u8[32768]{0}', space=vmem, size = 0x8000, scoped, tag = 'output window, operand 0']
    %7 = vsyncpa [#allocation4], 0
    %s8 = scalar_lea.sflag [#allocation4], 1
    %9 = vsyncpa %s8, 0
    %10 = vsyncpa [#allocation7], 0
    %s11 = scalar_lea.sflag [#allocation7], 1
    %12 = vsyncpa %s11, 0
    %13 = vsyncpa [#allocation5], 0
    %s14 = scalar_lea.sflag [#allocation5], 1
    %15 = vsyncpa %s14, 0
    loop: start=0, step=1, limit=4
    $region2: #{tpu_custom_call.1} parent=1 // loop_pre_header
      _
    $region3: #{tpu_custom_call.1} parent=1 // loop_header
      %s17 = sphi 0, %s21
      %p18 = scmp.ge.s32.totalorder %s17, 4
      %s24 = sphi 0, %s36
      %s25 = sphi 0, %s32
      %s26 = sphi 0, %s24
      %s27 = sphi 0, %s25
      %s28 = sphi 0, %s26
      %s29 = sphi 0, %s27
      %s45 = sphi 0, %s47
      %s48 = sphi 0, %s45
      %s49 = sphi 0, %s48
      %s65 = sphi 0, %s49
      %s77 = sphi 0, %s79
      %s80 = sphi 0, %s77
      %s81 = sphi 0, %s80
      %s97 = sphi 0, %s81
      %s103 = sphi 0, %s105
      %s106 = sphi 0, %s103
      %s107 = sphi 0, %s106
      %s123 = sphi 0, %s107
    $region4: #{tpu_custom_call.1} parent=1 // loop_header_branch
      %20 = sbr.rel (%p18) target = $region8
    $region5: #{tpu_custom_call.1} parent=1 // loop_body
      %s22 = ssub.s32 %s17, 1
      %s23 = ssub.s32 %s17, 2
      %s30 = sadd.s32 1, %s25
      %p31 = scmp.ge.s32.totalorder %s30, 1
      %s32 = scalar_select %p31, 0, %s30
      %s33 = sadd.s32 1, %s24
      %s34 = scalar_select %p31, %s33, %s24
      %p35 = scmp.ge.s32.totalorder %s34, 2
      %s36 = scalar_select %p35, 0, %s34
      %s37 = sadd.s32 %s24, %s25
      %p38 = scmp.lt.s32.totalorder %s37, 0
      %s39 = scalar_select %p38, %s37, 0
      %s40 = sadd.s32 %s36, %s32
      %p41 = scmp.lt.s32.totalorder %s40, 0
      %s42 = scalar_select %p41, %s40, 0
      %s43 = ssub.s32 %s39, %s42
      %p44 = scmp.eq.s32.totalorder %s43, 0
      %s46 = sadd.s32 %s45, 1
      %s47 = scalar_select %p44, %s45, %s46
      %p50 = pneg %p44
      %p51 = scmp.eq.s32.totalorder %s17, 1
      %p52 = por %p50, %p51
      %p53 = scmp.ne.s32.totalorder %s45, %s48
      %p54 = scmp.eq.s32.totalorder %s17, 0
      %p55 = por %p53, %p54
      %p56 = scmp.ne.s32.totalorder %s45, %s48
      %p57 = scmp.eq.s32.totalorder %s22, 1
      %p58 = por %p56, %p57
      %p59 = scmp.ne.s32.totalorder %s48, %s49
      %p60 = scmp.eq.s32.totalorder %s22, 0
      %p61 = por %p59, %p60
      %p62 = scmp.ne.s32.totalorder %s48, %s49
      %p63 = scmp.eq.s32.totalorder %s23, 1
      %p64 = por %p62, %p63
      %p66 = scmp.ne.s32.totalorder %s49, %s65
      %p67 = scmp.eq.s32.totalorder %s23, 0
      %p68 = por %p66, %p67
      %s69 = sadd.s32 %s24, %s25
      %p70 = scmp.lt.s32.totalorder %s69, 0
      %s71 = scalar_select %p70, %s69, 0
      %s72 = sadd.s32 %s36, %s32
      %p73 = scmp.lt.s32.totalorder %s72, 0
      %s74 = scalar_select %p73, %s72, 0
      %s75 = ssub.s32 %s71, %s74
      %p76 = scmp.eq.s32.totalorder %s75, 0
      %s78 = sadd.s32 %s77, 1
      %s79 = scalar_select %p76, %s77, %s78
      %p82 = pneg %p76
      %p83 = scmp.eq.s32.totalorder %s17, 1
      %p84 = por %p82, %p83
      %p85 = scmp.ne.s32.totalorder %s77, %s80
      %p86 = scmp.eq.s32.totalorder %s17, 0
      %p87 = por %p85, %p86
      %p88 = scmp.ne.s32.totalorder %s77, %s80
      %p89 = scmp.eq.s32.totalorder %s22, 1
      %p90 = por %p88, %p89
      %p91 = scmp.ne.s32.totalorder %s80, %s81
      %p92 = scmp.eq.s32.totalorder %s22, 0
      %p93 = por %p91, %p92
      %p94 = scmp.ne.s32.totalorder %s80, %s81
      %p95 = scmp.eq.s32.totalorder %s23, 1
      %p96 = por %p94, %p95
      %p98 = scmp.ne.s32.totalorder %s81, %s97
      %p99 = scmp.eq.s32.totalorder %s23, 0
      %p100 = por %p98, %p99
      %s101 = ssub.s32 %s24, %s36
      %p102 = scmp.eq.s32.totalorder %s101, 0
      %s104 = sadd.s32 %s103, 1
      %s105 = scalar_select %p102, %s103, %s104
      %p108 = pneg %p102
      %p109 = scmp.eq.s32.totalorder %s17, 1
      %p110 = por %p108, %p109
      %p111 = scmp.ne.s32.totalorder %s103, %s106
      %p112 = scmp.eq.s32.totalorder %s17, 0
      %p113 = por %p111, %p112
      %p114 = scmp.ne.s32.totalorder %s103, %s106
      %p115 = scmp.eq.s32.totalorder %s22, 1
      %p116 = por %p114, %p115
      %p117 = scmp.ne.s32.totalorder %s106, %s107
      %p118 = scmp.eq.s32.totalorder %s22, 0
      %p119 = por %p117, %p118
      %p120 = scmp.ne.s32.totalorder %s106, %s107
      %p121 = scmp.eq.s32.totalorder %s23, 1
      %p122 = por %p120, %p121
      %p124 = scmp.ne.s32.totalorder %s107, %s123
      %p125 = scmp.eq.s32.totalorder %s23, 0
      %p126 = por %p124, %p125
      %p127 = scmp.le.s32.totalorder 1, %s17
      %p128 = scmp.lt.s32.totalorder %s17, 3
      %p129 = pnand %p127, %p128
      %p130 = pneg %p129
      // Predicated region
      $region9: #{tpu_custom_call.1} parent=5 // pred_check
        _
      $region10: #{tpu_custom_call.1} parent=5 // pred_check_branch
        %132 = sbr.rel (%p129) target = $region12
      $region11: #{tpu_custom_call.1} parent=5 // pred_region
        %s133 = ssub.s32 %s17, 1
      $region12: #{tpu_custom_call.1} parent=5 // pred_fallthru
        _
      %p134 = scmp.lt.s32.totalorder %s17, 2
      // Predicated region
      $region13: #{tpu_custom_call.1} parent=5 // pred_check
        %p135 = pneg %p134
      $region14: #{tpu_custom_call.1} parent=5 // pred_check_branch
        %137 = sbr.rel (%p135) target = $region16
      $region15: #{tpu_custom_call.1} parent=5 // pred_region
        // Predicated region
        $region17: #{tpu_custom_call.1} parent=15 // pred_check
          %p138 = pneg %p55
        $region18: #{tpu_custom_call.1} parent=15 // pred_check_branch
          %140 = sbr.rel (%p138) target = $region20
        $region19: #{tpu_custom_call.1} parent=15 // pred_region
          %s141 = sand.u32 %s45, 1
          %s142 = scalar_lea.sflag [#allocation4], %s141
          %s143 = sand.u32 %s45, 1
          %s144 = smul.addr %s143, 32
          %s145 = scalar_lea.vmem [#allocation3], %s144
          %s146 = sadd.s32 %s24, %s25
          %p147 = scmp.lt.s32.totalorder %s146, 0
          %s148 = scalar_select %p147, %s146, 0
          %s149 = smul.u32 4, %s148
          %s150 = ssub.s32 2, %s149
          %s151 = smul.u32 128, %s150
          %s153 = ssub.s32 512, %s151
          %154 = vsyncadd %s142, %s153
          %p155 = scmp.ne.s32.totalorder 0, %s151
          %s156 = smul.addr %s149, 128
          %s157 = scalar_lea.hbm %s0, %s156
          %s158 = smul.u32 8, %s150
          %s159 = sshll.u32 %s145, 4
          %s160 = int_to_ptr.vmem [resolvable:$true] %s159
          %s161 = sshll.u32 %s158, 4
          %165 = dma.hbm_to_vmem [thread:$0]  (%p155), %s157, %s161, %s160, %s142, 128, 128, 8
        $region20: #{tpu_custom_call.1} parent=15 // pred_fallthru
          _
        // Predicated region
        $region21: #{tpu_custom_call.1} parent=15 // pred_check
          %p166 = pneg %p87
        $region22: #{tpu_custom_call.1} parent=15 // pred_check_branch
          %168 = sbr.rel (%p166) target = $region24
        $region23: #{tpu_custom_call.1} parent=15 // pred_region
          %s169 = sand.u32 %s77, 1
          %s170 = scalar_lea.sflag [#allocation7], %s169
          %s171 = sand.u32 %s77, 1
          %s172 = smul.addr %s171, 32
          %s173 = scalar_lea.vmem [#allocation6], %s172
          %s174 = sadd.s32 %s24, %s25
          %p175 = scmp.lt.s32.totalorder %s174, 0
          %s176 = scalar_select %p175, %s174, 0
          %s177 = smul.u32 4, %s176
          %s178 = ssub.s32 2, %s177
          %s179 = smul.u32 128, %s178
          %s181 = ssub.s32 512, %s179
          %182 = vsyncadd %s170, %s181
          %p183 = scmp.ne.s32.totalorder 0, %s179
          %s184 = smul.addr %s177, 128
          %s185 = scalar_lea.hbm %s1, %s184
          %s186 = smul.u32 8, %s178
          %s187 = sshll.u32 %s173, 4
          %s188 = int_to_ptr.vmem [resolvable:$true] %s187
          %s189 = sshll.u32 %s186, 4
          %193 = dma.hbm_to_vmem [thread:$0]  (%p183), %s185, %s189, %s188, %s170, 128, 128, 8
        $region24: #{tpu_custom_call.1} parent=15 // pred_fallthru
          _
      $region16: #{tpu_custom_call.1} parent=5 // pred_fallthru
        _
      %p194 = scmp.le.s32.totalorder 1, %s17
      %p195 = scmp.lt.s32.totalorder %s17, 3
      %p196 = pnand %p194, %p195
      %p197 = pneg %p196
      // Predicated region
      $region25: #{tpu_custom_call.1} parent=5 // pred_check
        _
      $region26: #{tpu_custom_call.1} parent=5 // pred_check_branch
        %199 = sbr.rel (%p196) target = $region28
      $region27: #{tpu_custom_call.1} parent=5 // pred_region
        %s200 = ssub.s32 %s17, 1
        %s201 = sand.u32 %s48, 1
        %s202 = scalar_lea.sflag [#allocation4], %s201
        %s203 = sand.u32 %s48, 1
        %s204 = smul.addr %s203, 32
        %s205 = scalar_lea.vmem [#allocation3], %s204
        // Predicated region
        $region29: #{tpu_custom_call.1} parent=27 // pred_check
          %p206 = pneg %p61
        $region30: #{tpu_custom_call.1} parent=27 // pred_check_branch
          %208 = sbr.rel (%p206) target = $region32
        $region31: #{tpu_custom_call.1} parent=27 // pred_region
          %209 = dma.done %s202, 512
        $region32: #{tpu_custom_call.1} parent=27 // pred_fallthru
          _
        %s210 = sand.u32 %s80, 1
        %s211 = scalar_lea.sflag [#allocation7], %s210
        %s212 = sand.u32 %s80, 1
        %s213 = smul.addr %s212, 32
        %s214 = scalar_lea.vmem [#allocation6], %s213
        // Predicated region
        $region33: #{tpu_custom_call.1} parent=27 // pred_check
          %p215 = pneg %p93
        $region34: #{tpu_custom_call.1} parent=27 // pred_check_branch
          %217 = sbr.rel (%p215) target = $region36
        $region35: #{tpu_custom_call.1} parent=27 // pred_region
          %218 = dma.done %s211, 512
        $region36: #{tpu_custom_call.1} parent=27 // pred_fallthru
          _
        %s219 = sand.u32 %s48, 1
        %s220 = scalar_lea.sflag [#allocation4], %s219
        %s221 = sand.u32 %s48, 1
        %s222 = smul.addr %s221, 32
        %s223 = scalar_lea.vmem [#allocation3], %s222
        %p224 = pneg %p61
        %p225 = pneg %p58
        %s226 = sand.u32 %s80, 1
        %s227 = scalar_lea.sflag [#allocation7], %s226
        %s228 = sand.u32 %s80, 1
        %s229 = smul.addr %s228, 32
        %s230 = scalar_lea.vmem [#allocation6], %s229
        %p231 = pneg %p93
        %p232 = pneg %p90
        %p233 = pneg %p119
        %p234 = pneg %p116
        %s235 = sand.u32 %s106, 1
        %s236 = scalar_lea.sflag [#allocation5], %s235
        %s237 = sand.u32 %s106, 1
        %s238 = smul.addr %s237, 32
        %s239 = scalar_lea.vmem [#allocation8], %s238
        %s240 = sadd.s32 %s26, %s27
        %p241 = scmp.lt.s32.totalorder %s240, 0
        %s242 = scalar_select %p241, %s240, 0
        %s243 = smul.u32 4, %s242
        %s244 = ssub.s32 2, %s243
        %s245 = smul.u32 128, %s244
        %s246 = sadd.s32 %s26, %s27
        %p247 = scmp.lt.s32.totalorder %s246, 0
        %s248 = scalar_select %p247, %s246, 0
        %s249 = smul.u32 4, %s248
        %s250 = ssub.s32 2, %s249
        %s251 = smul.u32 128, %s250
        %s252 = sadd.s32 %s26, %s27
        %p253 = scmp.eq.s32.totalorder %s27, 0
        // Predicated region
        $region37: #{tpu_custom_call.1} parent=27 // pred_check
          %p254 = pneg %p253
        $region38: #{tpu_custom_call.1} parent=27 // pred_check_branch
          %256 = sbr.rel (%p254) target = $region40
        $region39: #{tpu_custom_call.1} parent=27 // pred_region
          %257 = vst [vmem:[#allocation2] sm:$0xff] 0.0
          %258 = vst [vmem:[#allocation2 + $0x8] sm:$0xff] 0.0
          %259 = vst [vmem:[#allocation2 + $0x10] sm:$0xff] 0.0
          %260 = vst [vmem:[#allocation2 + $0x18] sm:$0xff] 0.0
        $region40: #{tpu_custom_call.1} parent=27 // pred_fallthru
          _
        %v261 = vld [vmem:[%s205] sm:$0xff]
        %v262 = vld [vmem:[%s205 + $0x8] sm:$0xff]
        %v263 = vld [vmem:[%s205 + $0x10] sm:$0xff]
        %v264 = vld [vmem:[%s205 + $0x18] sm:$0xff]
        %v265 = vld [vmem:[%s214] sm:$0xff]
        %v266 = vld [vmem:[%s214 + $0x8] sm:$0xff]
        %v267 = vld [vmem:[%s214 + $0x10] sm:$0xff]
        %v268 = vld [vmem:[%s214 + $0x18] sm:$0xff]
        %v269 = vlog2.pop %v261
        %v270 = vmul.f32 %v269, 0.6931472
        %v271 = vlog2.pop %v262
        %v272 = vmul.f32 %v271, 0.6931472
        %v273 = vlog2.pop %v263
        %v274 = vmul.f32 %v273, 0.6931472
        %v275 = vlog2.pop %v264
        %v276 = vmul.f32 %v275, 0.6931472
        %v277 = vmax.f32 %v270, -100.0
        %v278 = vmax.f32 %v272, -100.0
        %v279 = vmax.f32 %v274, -100.0
        %v280 = vmax.f32 %v276, -100.0
        %v281 = vsub.f32 1.0, %v261
        %v282 = vsub.f32 1.0, %v262
        %v283 = vsub.f32 1.0, %v263
        %v284 = vsub.f32 1.0, %v264
        %v285 = vlog2.pop %v281
        %v286 = vmul.f32 %v285, 0.6931472
        %v287 = vlog2.pop %v282
        %v288 = vmul.f32 %v287, 0.6931472
        %v289 = vlog2.pop %v283
        %v290 = vmul.f32 %v289, 0.6931472
        %v291 = vlog2.pop %v284
        %v292 = vmul.f32 %v291, 0.6931472
        %v293 = vmax.f32 %v286, -100.0
        %v294 = vmax.f32 %v288, -100.0
        %v295 = vmax.f32 %v290, -100.0
        %v296 = vmax.f32 %v292, -100.0
        %v297 = vmul.f32 %v265, %v277
        %v298 = vmul.f32 %v266, %v278
        %v299 = vmul.f32 %v267, %v279
        %v300 = vmul.f32 %v268, %v280
        %v301 = vsub.f32 1.0, %v265
        %v302 = vsub.f32 1.0, %v266
        %v303 = vsub.f32 1.0, %v267
        %v304 = vsub.f32 1.0, %v268
        %v305 = vmul.f32 %v301, %v293
        %v306 = vmul.f32 %v302, %v294
        %v307 = vmul.f32 %v303, %v295
        %v308 = vmul.f32 %v304, %v296
        %v309 = vadd.f32 %v297, %v305
        %v310 = vadd.f32 %v298, %v306
        %v311 = vadd.f32 %v299, %v307
        %v312 = vadd.f32 %v300, %v308
        %v313 = vsub.f32 0.0, %v309
        %v314 = vsub.f32 0.0, %v310
        %v315 = vsub.f32 0.0, %v311
        %v316 = vsub.f32 0.0, %v312
        %v317 = vsub.f32 0.0, %v313
        %v318 = vsub.f32 0.0, %v314
        %v319 = vsub.f32 0.0, %v315
        %v320 = vsub.f32 0.0, %v316
        %v321 = vmul.f32 %v317, 1.442695
        %v322 = vpow.pop %v321
        %v323 = vmul.f32 %v318, 1.442695
        %v324 = vpow.pop %v323
        %v325 = vmul.f32 %v319, 1.442695
        %v326 = vpow.pop %v325
        %v327 = vmul.f32 %v320, 1.442695
        %v328 = vpow.pop %v327
        %v329 = vsub.f32 1.0, %v322
        %v330 = vsub.f32 1.0, %v324
        %v331 = vsub.f32 1.0, %v326
        %v332 = vsub.f32 1.0, %v328
        %v333 = vmul.f32 %v329, %v329
        %v334 = vmul.f32 %v330, %v330
        %v335 = vmul.f32 %v331, %v331
        %v336 = vmul.f32 %v332, %v332
        %v337 = vmul.f32 %v333, %v313
        %v338 = vmul.f32 %v334, %v314
        %v339 = vmul.f32 %v335, %v315
        %v340 = vmul.f32 %v336, %v316
        %s341 = sadd.s32 %s252, 1
        %s342 = smul.u32 %s341, 32
        %p343 = scmp.le.s32.totalorder %s342, 16
        // Predicated region
        $region41: #{tpu_custom_call.1} parent=27 // pred_check
          %p344 = pneg %p343
        $region42: #{tpu_custom_call.1} parent=27 // pred_check_branch
          %346 = sbr.rel (%p344) target = $region44
        $region43: #{tpu_custom_call.1} parent=27 // pred_region
          %v347 = vld [vmem:[#allocation2] sm:$0xff]
          %v348 = vld [vmem:[#allocation2 + $0x8] sm:$0xff]
          %v349 = vld [vmem:[#allocation2 + $0x10] sm:$0xff]
          %v350 = vld [vmem:[#allocation2 + $0x18] sm:$0xff]
          %v351 = vadd.f32 %v337, 0.0
          %v352 = vadd.f32 %v338, 0.0
          %v353 = vadd.f32 %v339, 0.0
          %v354 = vadd.f32 %v340, 0.0
          %v355 = vadd.f32 %v347, %v351
          %v356 = vadd.f32 %v348, %v352
          %v357 = vadd.f32 %v349, %v353
          %v358 = vadd.f32 %v350, %v354
          %359 = vst [vmem:[#allocation2] sm:$0xff] %v355
          %360 = vst [vmem:[#allocation2 + $0x8] sm:$0xff] %v356
          %361 = vst [vmem:[#allocation2 + $0x10] sm:$0xff] %v357
          %362 = vst [vmem:[#allocation2 + $0x18] sm:$0xff] %v358
        $region44: #{tpu_custom_call.1} parent=27 // pred_fallthru
          _
        %p363 = scmp.gt.s32.totalorder %s342, 16
        // Predicated region
        $region45: #{tpu_custom_call.1} parent=27 // pred_check
          %p364 = pneg %p363
        $region46: #{tpu_custom_call.1} parent=27 // pred_check_branch
          %366 = sbr.rel (%p364) target = $region48
        $region47: #{tpu_custom_call.1} parent=27 // pred_region
          %s367 = smul.u32 %s252, 32
          %s368 = ssub.s32 16, %s367
          %v369 = vlaneseq
          %v370 = vshrl.u32 %v369, 7
          %v371 = vadd.s32 %v370, 8
          %v372 = vadd.s32 %v370, 16
          %v373 = vadd.s32 %v370, 24
          %v374 = vstv %s368
          %vm375 = vcmp.lt.s32.totalorder %v370, %v374
          %vm376 = vcmp.lt.s32.totalorder %v371, %v374
          %vm377 = vcmp.lt.s32.totalorder %v372, %v374
          %vm378 = vcmp.lt.s32.totalorder %v373, %v374
          %v379 = vsel %vm375, %v337, 0.0
          %v380 = vsel %vm376, %v338, 0.0
          %v381 = vsel %vm377, %v339, 0.0
          %v382 = vsel %vm378, %v340, 0.0
          %v383 = vld [vmem:[#allocation2] sm:$0xff]
          %v384 = vld [vmem:[#allocation2 + $0x8] sm:$0xff]
          %v385 = vld [vmem:[#allocation2 + $0x10] sm:$0xff]
          %v386 = vld [vmem:[#allocation2 + $0x18] sm:$0xff]
          %v387 = vadd.f32 %v379, 0.0
          %v388 = vadd.f32 %v380, 0.0
          %v389 = vadd.f32 %v381, 0.0
          %v390 = vadd.f32 %v382, 0.0
          %v391 = vadd.f32 %v383, %v387
          %v392 = vadd.f32 %v384, %v388
          %v393 = vadd.f32 %v385, %v389
          %v394 = vadd.f32 %v386, %v390
          %395 = vst [vmem:[#allocation2] sm:$0xff] %v391
          %396 = vst [vmem:[#allocation2 + $0x8] sm:$0xff] %v392
          %397 = vst [vmem:[#allocation2 + $0x10] sm:$0xff] %v393
          %398 = vst [vmem:[#allocation2 + $0x18] sm:$0xff] %v394
        $region48: #{tpu_custom_call.1} parent=27 // pred_fallthru
          _
        // Predicated region
        $region49: #{tpu_custom_call.1} parent=27 // pred_check
          %p399 = pneg %p253
        $region50: #{tpu_custom_call.1} parent=27 // pred_check_branch
          %401 = sbr.rel (%p399) target = $region52
        $region51: #{tpu_custom_call.1} parent=27 // pred_region
          %v402 = vld [vmem:[#allocation2] sm:$0xff]
          %v403 = vld [vmem:[#allocation2 + $0x8] sm:$0xff]
          %v404 = vld [vmem:[#allocation2 + $0x10] sm:$0xff]
          %v405 = vld [vmem:[#allocation2 + $0x18] sm:$0xff]
          %406 = vst [vmem:[%s239] sm:$0xff] %v402
          %407 = vst [vmem:[%s239 + $0x8] sm:$0xff] %v403
          %408 = vst [vmem:[%s239 + $0x10] sm:$0xff] %v404
          %409 = vst [vmem:[%s239 + $0x18] sm:$0xff] %v405
        $region52: #{tpu_custom_call.1} parent=27 // pred_fallthru
          _
        %s410 = sand.u32 %s106, 1
        %s411 = scalar_lea.sflag [#allocation5], %s410
        %s412 = sand.u32 %s106, 1
        %s413 = smul.addr %s412, 32
        %s414 = scalar_lea.vmem [#allocation8], %s413
        // Predicated region
        $region53: #{tpu_custom_call.1} parent=27 // pred_check
          %p415 = pneg %p116
        $region54: #{tpu_custom_call.1} parent=27 // pred_check_branch
          %417 = sbr.rel (%p415) target = $region56
        $region55: #{tpu_custom_call.1} parent=27 // pred_region
          %s419 = ssub.s32 512, 512
          %420 = vsyncadd %s411, %s419
          %s421 = smul.addr %s26, 4
          %s422 = smul.addr %s421, 128
          %s423 = scalar_lea.hbm %s2, %s422
          %s424 = sshll.u32 %s414, 4
          %s425 = int_to_ptr.vmem [resolvable:$true] %s424
          %430 = dma.vmem_to_hbm [thread:$0]  %s425, 512, %s423, %s411, 128, 128, 8
        $region56: #{tpu_custom_call.1} parent=27 // pred_fallthru
          _
      $region28: #{tpu_custom_call.1} parent=5 // pred_fallthru
        _
      %p431 = scmp.le.s32.totalorder 2, %s17
      // Predicated region
      $region57: #{tpu_custom_call.1} parent=5 // pred_check
        %p432 = pneg %p431
      $region58: #{tpu_custom_call.1} parent=5 // pred_check_branch
        %434 = sbr.rel (%p432) target = $region60
      $region59: #{tpu_custom_call.1} parent=5 // pred_region
        %s435 = ssub.s32 %s17, 2
        // Predicated region
        $region61: #{tpu_custom_call.1} parent=59 // pred_check
          %p436 = pneg %p122
        $region62: #{tpu_custom_call.1} parent=59 // pred_check_branch
          %438 = sbr.rel (%p436) target = $region64
        $region63: #{tpu_custom_call.1} parent=59 // pred_region
          %s439 = sand.u32 %s107, 1
          %s440 = scalar_lea.sflag [#allocation5], %s439
          %s441 = sand.u32 %s107, 1
          %s442 = smul.addr %s441, 32
          %s443 = scalar_lea.vmem [#allocation8], %s442
          %444 = dma.done %s440, 512
        $region64: #{tpu_custom_call.1} parent=59 // pred_fallthru
          _
      $region60: #{tpu_custom_call.1} parent=5 // pred_fallthru
        _
    $region6: #{tpu_custom_call.1} parent=1 // loop_footer
      %s21 = sadd.s32 1, %s17
    $region7: #{tpu_custom_call.1} parent=1 // loop_footer_branch
      %16 = sbr.rel target = $region3
    $region8: #{tpu_custom_call.1} parent=1 // loop_exit
      _
    %445 = vsyncpa [#allocation4], 1
    %s446 = scalar_lea.sflag [#allocation4], 1
    %447 = vsyncpa %s446, 1
    %448 = vsyncpa [#allocation7], 1
    %s449 = scalar_lea.sflag [#allocation7], 1
    %450 = vsyncpa %s449, 1
    %451 = vsyncpa [#allocation5], 1
    %s452 = scalar_lea.sflag [#allocation5], 1
    %453 = vsyncpa %s452, 1

</llo_original>
